<compile_context>
chip_gen: v7x
topology: tpu7x:2x2x1
jax: 0.10.0
libtpu: 0.0.40
codegen_flags: <defaults>
</compile_context>

<pallas_src>
import jax
import jax.numpy as jnp
from jax import lax
from jax.experimental import pallas as pl
from jax.experimental.pallas import tpu as pltpu


def _cdiv(a, b):
    return (a + b - 1) // b


def _pick_tile(dim, target, align):
    """Largest tile <= target that is a multiple of `align` and never exceeds
    `dim`, or the full `dim` when dim <= align (full-dim blocks are legal)."""
    if dim <= align:
        return dim
    if dim % align == 0:
        return min(target, dim)
    return min(target, (dim // align) * align)


def _make_reducer_kernel(*, M, tm, bn, m_tiles, use_hit, mask_rows,
                         use_scratch, f32_split):
    """Build the kernel body; all sizes/flags are static Python values."""

    def kernel(hit_ref, idx_ref, x_ref, o_ref, *scratch):
        acc_ref = scratch[0] if use_scratch else o_ref
        ni = pl.program_id(0)          # output-row (n) tile
        mi = pl.program_id(2)          # source-row (reduction) tile

        @pl.when(mi == 0)
        def _():
            acc_ref[...] = jnp.zeros_like(acc_ref)

        def contribute():
            x = x_ref[...]
            if mask_rows:
                # Ragged last m-tile: zero rows beyond M so unspecified
                # out-of-bounds data (possibly NaN/Inf) cannot leak in.
                row = lax.broadcasted_iota(jnp.int32, x.shape, 0)
                x = jnp.where(mi * tm + row < M, x, jnp.zeros_like(x))
            if not jnp.issubdtype(x.dtype, jnp.floating):
                # TODO(synk): integer inputs go through the f32 MXU path;
                # sums are exact only up to 2^24.
                x = x.astype(jnp.float32)

            # One-hot built directly in (bn, tm) orientation for the current
            # n-window -> no XLU transpose.  Out-of-range / sentinel (-1)
            # indices match nothing and are dropped.
            seg = ni * bn + lax.broadcasted_iota(jnp.int32, (bn, tm), 0)
            one_hot = seg == idx_ref[...]                     # (bn, tm) bool

            if f32_split:
                # bf16 hi/lo split of f32: two bf16 MXU passes, f32 accum.
                oh = one_hot.astype(jnp.bfloat16)
                hi = x.astype(jnp.bfloat16)
                lo = (x - hi.astype(jnp.float32)).astype(jnp.bfloat16)
                contrib = jnp.dot(oh, hi, preferred_element_type=jnp.float32)
                contrib = contrib + jnp.dot(
                    oh, lo, preferred_element_type=jnp.float32)
            else:
                contrib = jnp.dot(one_hot.astype(x.dtype), x,
                                  preferred_element_type=jnp.float32)
            acc_ref[...] += contrib

        if use_hit:
            # Skip m-tiles that contribute nothing to this n-tile.
            pl.when(hit_ref[ni * m_tiles + mi] != 0)(contribute)
        else:
            contribute()

        if use_scratch:
            @pl.when(mi == pl.num_programs(2) - 1)
            def _():
                o_ref[...] = acc_ref[...].astype(o_ref.dtype)

    return kernel


def reducer_forward(tensor, idx, n, *, reduce="sum", out=None,
                    tm=None, tn=None, bn=None, f32_via_bf16=False):
    """Pallas-TPU equivalent of easier.Reducer.forward (reduce='sum')."""
    if reduce != "sum":
        # TODO(synk): 'prod'/'amax'/'amin'/'mean' scatter_reduce modes are not
        # lowered here.
        raise NotImplementedError("only reduce='sum' is supported")

    M = int(tensor.shape[0])
    feat_shape = tuple(int(s) for s in tensor.shape[1:])
    D = 1
    for s in feat_shape:
        D *= s
    n = int(n)
    if out is not None and out.shape[0] != n:
        raise ValueError(
            f"{out.shape[0]} the length of the first dimension of `out` and "
            f"{n} the specified `Reducer.n` do not match")

    x2d = tensor.reshape(M, D)          # merges trailing dims only (no copy)
    elem = jnp.dtype(tensor.dtype).itemsize

    # ---- tile sizes -------------------------------------------------------
    if tm is None:
        tm = M if M <= 512 else 512     # contraction tile (multiple of 256)
    tm = min(tm, M)
    if tm < M and tm % 128 != 0:
        raise ValueError("tm must be a multiple of 128 when tm < M")
    if tn is None:
        tn = _pick_tile(D, 1024 if D >= 1024 else 512, 128)
    else:
        tn = min(tn, D)
        if tn < D and tn % 128 != 0:
            raise ValueError("tn must be a multiple of 128 when tn < D")
    if bn is None:
        bn = _pick_tile(n, 512, 8)
    else:
        bn = min(bn, n)
        if bn < n and bn % 8 != 0:
            raise ValueError("bn must be a multiple of 8 when bn < n")

    # ---- generation-aware VMEM budget --------------------------------------
    try:
        phys_vmem = int(pltpu.get_tpu_info().vmem_capacity_bytes)
    except Exception:
        phys_vmem = 64 << 20            # conservative default (v7x)
    vmem_cap = (phys_vmem * 3) // 4     # 48 MiB on v7x, 96 MiB on v5e/v6e

    def _vmem_est(tm_, tn_, bn_):
        return (2 * tm_ * tn_ * elem        # x tiles (double-buffered)
                + 2 * 8 * tm_ * 4           # idx tiles (sublane-padded)
                + 2 * bn_ * tn_ * elem      # output block (double-buffered)
                + bn_ * tn_ * 4             # f32 accumulator scratch
                + bn_ * tm_ * (4 + elem)    # one-hot build + cast
                + bn_ * tn_ * 4             # MXU result
                + tm_ * tn_ * 4)            # masked / widened x temporary

    while 2 * _vmem_est(tm, tn, bn) > vmem_cap and tn >= 256:
        tn //= 2
    vmem_limit = int(min(max(2 * _vmem_est(tm, tn, bn), 32 << 20), vmem_cap))

    # ---- grid ---------------------------------------------------------------
    m_tiles = _cdiv(M, tm)
    d_tiles = _cdiv(D, tn)
    n_tiles = _cdiv(n, bn)
    M_pad = m_tiles * tm
    mask_rows = M_pad != M              # implies m_tiles > 1 (since tm <= M)

    # idx: lane-major (1, M_pad); only this cheap O(M) array is ever padded.
    idx_i32 = idx.astype(jnp.int32).reshape(M)
    idx_pad = idx_i32
    if M_pad != M:
        idx_pad = jnp.pad(idx_i32, (0, M_pad - M), constant_values=-1)
    idx2d = idx_pad.reshape(1, M_pad)
    # NOTE: out-of-range indices (idx < 0 or idx >= n) are silently dropped
    # (zero one-hot column); PyTorch scatter_reduce_ would treat this as UB.

    # Per-(n-tile, m-tile) hit mask for MXU-work skipping (scalar prefetch).
    use_hit = 1 < n_tiles * m_tiles <= 16384
    if use_hit:
        nt_of_row = jnp.clip(idx_i32 // bn, 0, n_tiles - 1)
        mt_of_row = jnp.arange(M, dtype=jnp.int32) // tm
        lin = nt_of_row * m_tiles + mt_of_row
        hit = jnp.zeros((n_tiles * m_tiles,), jnp.int32).at[lin].add(1)
        hit = (hit > 0).astype(jnp.int32)
    else:
        hit = jnp.ones((1,), jnp.int32)

    use_scratch = tensor.dtype != jnp.float32
    f32_split = bool(f32_via_bf16) and tensor.dtype == jnp.float32

    kernel = _make_reducer_kernel(
        M=M, tm=tm, bn=bn, m_tiles=m_tiles, use_hit=use_hit,
        mask_rows=mask_rows, use_scratch=use_scratch, f32_split=f32_split)

    cost = pl.CostEstimate(
        flops=int(2 * M * n * D),
        transcendentals=0,
        bytes_accessed=int(n_tiles * M * D * elem + n * D * elem + M_pad * 4))

    out2d = pl.pallas_call(
        kernel,
        out_shape=jax.ShapeDtypeStruct((n, D), tensor.dtype),
        grid_spec=pltpu.PrefetchScalarGridSpec(
            num_scalar_prefetch=1,
            grid=(n_tiles, d_tiles, m_tiles),        # reduction (m) axis last
            in_specs=[
                pl.BlockSpec((1, tm), lambda ni, j, mi, hit: (0, mi)),
                pl.BlockSpec((tm, tn), lambda ni, j, mi, hit: (mi, j)),
            ],
            out_specs=pl.BlockSpec((bn, tn), lambda ni, j, mi, hit: (ni, j)),
            scratch_shapes=([pltpu.VMEM((bn, tn), jnp.float32)]
                            if use_scratch else []),
        ),
        compiler_params=pltpu.CompilerParams(
            dimension_semantics=("parallel", "parallel", "arbitrary"),
            vmem_limit_bytes=vmem_limit,
        ),
        cost_estimate=cost,
    )(hit, idx2d, x2d)

    result = out2d.reshape((n,) + feat_shape)
    if out is not None:
        # include_self=False: rows receiving >=1 contribution take the pure
        # segment sum; untouched rows keep `out`'s value.
        valid = (idx_i32 >= 0) & (idx_i32 < n)
        counts = jnp.zeros((n,), jnp.int32).at[jnp.clip(idx_i32, 0, n - 1)] \
            .add(jnp.where(valid, 1, 0))
        touched = (counts > 0).reshape((n,) + (1,) * len(feat_shape))
        result = jnp.where(touched, result.astype(out.dtype), out)
    return result


if __name__ == "__main__":
    key = jax.random.PRNGKey(0)
    k_x, k_i, k_x2, k_i2 = jax.random.split(key, 4)

    # ---- small shapes consistent with the module ----------------------------
    M, F1, F2 = 16, 4, 8                # tensor (M, 4, 8), flattened D = 32
    n = 8                               # Reducer.n

    x = jax.random.normal(k_x, (M, F1, F2), dtype=jnp.float32)
    idx = jax.random.randint(k_i, (M,), 0, n, dtype=jnp.int32)

    out = jax.block_until_ready(reducer_forward(x, idx, n))
    ref = jnp.zeros((n, F1, F2), jnp.float32).at[idx].add(x)
    assert out.shape == (n, F1, F2)
    assert jnp.allclose(out, ref, atol=1e-5, rtol=1e-5)

    # bf16 input (f32 scratch accumulator, bf16 MXU operands).
    xb = x.astype(jnp.bfloat16)
    outb = jax.block_until_ready(reducer_forward(xb, idx, n))
    refb = (jnp.zeros((n, F1, F2), jnp.float32)
            .at[idx].add(xb.astype(jnp.float32))).astype(jnp.bfloat16)
    assert jnp.allclose(outb.astype(jnp.float32), refb.astype(jnp.float32),
                        atol=2e-2, rtol=2e-2)

    # f32 via bf16 hi/lo split (fast MXU path on v6e/v7x).
    outs = jax.block_until_ready(reducer_forward(x, idx, n, f32_via_bf16=True))
    assert jnp.allclose(outs, ref, atol=1e-3, rtol=1e-3)

    # ---- medium shape: exercises n/D/M tiling, ragged blocks, in-kernel row
    # masking and the scalar-prefetched (n-tile, m-tile) skip mask ------------
    M2, D2, n2 = 700, 160, 520
    x2 = jax.random.normal(k_x2, (M2, D2), dtype=jnp.float32)
    idx2 = jax.random.randint(k_i2, (M2,), 0, n2, dtype=jnp.int32)
    out2 = jax.block_until_ready(reducer_forward(x2, idx2, n2))
    ref2 = jnp.zeros((n2, D2), jnp.float32).at[idx2].add(x2)
    assert out2.shape == (n2, D2)
    assert jnp.allclose(out2, ref2, atol=1e-4, rtol=1e-4)

    print("KERNEL_OK")
</pallas_src>

<mosaic_0001>
module attributes {stable_mosaic.version = 11 : i64} {
  func.func @kernel(%arg0: i32, %arg1: i32, %arg2: i32, %arg3: memref<1xi32, #tpu.memory_space<smem>>, %arg4: memref<1x16xi32, #tpu.memory_space<vmem>>, %arg5: memref<16x32xf32, #tpu.memory_space<vmem>>, %arg6: memref<8x32xf32, #tpu.memory_space<vmem>>) attributes {dimension_semantics = [#tpu.dimension_semantics<parallel>, #tpu.dimension_semantics<parallel>, #tpu.dimension_semantics<arbitrary>], iteration_bounds = array<i64: 1, 1, 1>, scalar_prefetch = 1 : i64, scratch_operands = 0 : i64, tpu.core_type = #tpu.core_type<tc>, window_params = [{transform_indices = @transform_0, window_bounds = array<i64: 1, 16>}, {transform_indices = @transform_1, window_bounds = array<i64: 16, 32>}, {transform_indices = @transform_2, window_bounds = array<i64: 8, 32>}]} {
    %c0_i32 = arith.constant 0 : i32
    %0 = arith.cmpi eq, %arg2, %c0_i32 : i32
    %1 = arith.extui %0 : i1 to i32
    %c0_i32_0 = arith.constant 0 : i32
    %2 = arith.cmpi ne, %1, %c0_i32_0 : i32
    scf.if %2 {
      %cst_8 = arith.constant 0.000000e+00 : f32
      %17 = vector.broadcast %cst_8 : f32 to vector<8x32xf32>
      %c0_9 = arith.constant 0 : index
      %c0_10 = arith.constant 0 : index
      %18 = vector.load %arg6[%c0_9, %c0_10] : memref<8x32xf32, #tpu.memory_space<vmem>>, vector<8x32xf32>
      tpu.vector_store %arg6[%c0_9, %c0_10], %17 {strides = array<i32>} : memref<8x32xf32, #tpu.memory_space<vmem>>, vector<8x32xf32>,
    } else {
    }
    %c0 = arith.constant 0 : index
    %c0_1 = arith.constant 0 : index
    %3 = vector.load %arg5[%c0, %c0_1] : memref<16x32xf32, #tpu.memory_space<vmem>>, vector<16x32xf32>
    %c8_i32 = arith.constant 8 : i32
    %4 = arith.muli %arg0, %c8_i32 : i32
    %5 = tpu.iota {dimensions = array<i32: 0>} : vector<8x16xi32>
    %6 = vector.broadcast %4 : i32 to vector<8x16xi32>
    %7 = arith.addi %6, %5 : vector<8x16xi32>
    %c0_2 = arith.constant 0 : index
    %c0_3 = arith.constant 0 : index
    %8 = vector.load %arg4[%c0_2, %c0_3] : memref<1x16xi32, #tpu.memory_space<vmem>>, vector<1x16xi32>
    %9 = vector.broadcast %8 : vector<1x16xi32> to vector<8x16xi32>
    %10 = arith.cmpi eq, %7, %9 : vector<8x16xi32>
    %11 = arith.extui %10 : vector<8x16xi1> to vector<8x16xi32>
    %12 = arith.sitofp %11 : vector<8x16xi32> to vector<8x16xf32>
    %cst = arith.constant dense<0.000000e+00> : vector<8x32xf32>
    %13 = tpu.matmul %12, %3, %cst {dimension_numbers = #tpu.dot_dimension_numbers<[1], [0], [0], [1], [0, 0, 1, 1], [], []>} : vector<8x16xf32>, vector<16x32xf32>, vector<8x32xf32> -> vector<8x32xf32>
    %c0_4 = arith.constant 0 : index
    %c0_5 = arith.constant 0 : index
    %14 = vector.load %arg6[%c0_4, %c0_5] : memref<8x32xf32, #tpu.memory_space<vmem>>, vector<8x32xf32>
    %15 = arith.addf %14, %13 : vector<8x32xf32>
    %c0_6 = arith.constant 0 : index
    %c0_7 = arith.constant 0 : index
    %16 = vector.load %arg6[%c0_6, %c0_7] : memref<8x32xf32, #tpu.memory_space<vmem>>, vector<8x32xf32>
    tpu.vector_store %arg6[%c0_6, %c0_7], %15 {strides = array<i32>} : memref<8x32xf32, #tpu.memory_space<vmem>>, vector<8x32xf32>,
    return
  }
  func.func @transform_0(%arg0: i32, %arg1: i32, %arg2: i32, %arg3: memref<1xi32, #tpu.memory_space<smem>>) -> (i32, i32) {
    %c0_i32 = arith.constant 0 : i32
    %c0_i32_0 = arith.constant 0 : i32
    return %c0_i32, %arg2 : i32, i32
  }
  func.func @transform_1(%arg0: i32, %arg1: i32, %arg2: i32, %arg3: memref<1xi32, #tpu.memory_space<smem>>) -> (i32, i32) {
    %c0_i32 = arith.constant 0 : i32
    return %arg2, %arg1 : i32, i32
  }
  func.func @transform_2(%arg0: i32, %arg1: i32, %arg2: i32, %arg3: memref<1xi32, #tpu.memory_space<smem>>) -> (i32, i32) {
    %c0_i32 = arith.constant 0 : i32
    return %arg0, %arg1 : i32, i32
  }
}

</mosaic_0001>

<llo_original>
// kernel: tpu_custom_call.1
$region0: #{tpu_custom_call.1}
  #allocation0 [shape = 'u32[]', space=smem, size = 0x4, offset = 0x4, fixed_abs, tag = 'smem constant byte address 0x4 - core index']
  #allocation1 [shape = 'u32[144,128]{1,0:T(1,128)}', space=vmem, size = 0x12000, scoped, tag = 'internal scratch']
  #allocation2 [shape = 's32[1]{0}', space=sflag, size = 0x4, scoped, tag = 'scoped memory for tpu_custom_call.1']
  #allocation3 [shape = 's32[1]{0:T(128)S(6)}', space=smem, size = 0x200, scoped, tag = 'prefetched SMEM operand 0']
  %s0 = inlined_call_operand.<no memory space> [shape: s32[1], index: 0, kind: input, shape index: {}]
  %s1 = inlined_call_operand.vmem [shape: s32[1,16], index: 1, kind: input, shape index: {}]
  %s2 = inlined_call_operand.hbm [shape: f32[16,32], index: 2, kind: input, shape index: {}]
  %s3 = inlined_call_operand.hbm [shape: f32[8,32], index: 3, kind: output, shape index: {}]
  %s4 = sld [smem:[#allocation0]]
  $region26: #{tpu_custom_call.1} parent=0
    _
  %s6 = ssub.s32 1, %s4
  %s7 = scalar_select 0, %s6, %s4
  %8 = sst [smem:[#allocation3]] %s0
  $region1: #{tpu_custom_call.1} parent=0
    #allocation4 [shape = 'u8[8192]{0}', space=vmem, size = 0x2000, scoped, tag = 'input window, operand 2, single buffered']
    #allocation5 [shape = 's32[1]{0}', space=sflag, size = 0x4, scoped, tag = 'scoped memory for tpu_custom_call.1']
    #allocation6 [shape = 's32[1]{0}', space=sflag, size = 0x4, scoped, tag = 'scoped memory for tpu_custom_call.1']
    #allocation7 [shape = 'u8[4096]{0}', space=vmem, size = 0x1000, scoped, tag = 'output window, operand 0, single buffered']
    %9 = vsyncpa [#allocation5], 0
    %10 = vsyncpa [#allocation6], 0
    // Predicated region
    $region2: #{tpu_custom_call.1} parent=1 // pred_check
      _
    $region3: #{tpu_custom_call.1} parent=1 // pred_check_branch
      %12 = sbr.rel (0) target = $region5
    $region4: #{tpu_custom_call.1} parent=1 // pred_region
      _
    $region5: #{tpu_custom_call.1} parent=1 // pred_fallthru
      _
    // Predicated region
    $region6: #{tpu_custom_call.1} parent=1 // pred_check
      _
    $region7: #{tpu_custom_call.1} parent=1 // pred_check_branch
      %14 = sbr.rel (0) target = $region9
    $region8: #{tpu_custom_call.1} parent=1 // pred_region
      %s16 = ssub.s32 256, 256
      %17 = vsyncadd [#allocation5], %s16
      %s18 = sshll.u32 [#allocation4], 4
      %s19 = int_to_ptr.vmem [resolvable:$true] %s18
      %24 = dma.hbm_to_vmem [thread:$0]  %s2, 256, %s19, [#allocation5], 128, 128, 8
    $region9: #{tpu_custom_call.1} parent=1 // pred_fallthru
      _
    // Predicated region
    $region10: #{tpu_custom_call.1} parent=1 // pred_check
      _
    $region11: #{tpu_custom_call.1} parent=1 // pred_check_branch
      %26 = sbr.rel (0) target = $region13
    $region12: #{tpu_custom_call.1} parent=1 // pred_region
      %27 = dma.done [#allocation5], 256
    $region13: #{tpu_custom_call.1} parent=1 // pred_fallthru
      _
    %p28 = scmp.eq.s32.totalorder 0, 0
    // Predicated region
    $region14: #{tpu_custom_call.1} parent=1 // pred_check
      %p29 = pneg %p28
    $region15: #{tpu_custom_call.1} parent=1 // pred_check_branch
      %31 = sbr.rel (%p29) target = $region17
    $region16: #{tpu_custom_call.1} parent=1 // pred_region
      %vm32 = vcmask 261120
      %33 = vst.msk [vmem:[#allocation7] sm:$0xff] %vm32, 0.0
    $region17: #{tpu_custom_call.1} parent=1 // pred_fallthru
      _
    %v34 = vld [vmem:[#allocation4] sm:$0xff]
    %v35 = vld [vmem:[#allocation4 + $0x8] sm:$0xff]
    %s36 = smul.u32 0, 8
    %v37 = vlaneseq
    %v38 = vshrl.u32 %v37, 7
    %v39 = vstv %s36
    %v40 = vadd.s32 %v39, %v38
    %v41 = vld [vmem:[%s1] sm:$0x1]
    %v42 = vlaneseq
    %v43 = vshrl.u32 %v42, 7
    %v44 = vsub.s32 0, %v43
    %v45 = vrot.slane %v41, %v44
    %vm46 = vcmp.eq.s32.totalorder %v40, %v45
    %v47 = vsel %vm46, 1, 0
    %v48 = vcvt.s32.f32 %v47
    %vm49 = vcmask 130048
    %v51 = vsel %vm49, %v48, 0
    %53 = vmatprep.subr.mxu0 0.0
    %54 = vmatpush1.msra.mxu0 %v34
    %55 = vmatprep.subr.mxu0 0.0
    %56 = vmatpush1.msra.mxu0 %v35
    %57 = vmatprep.subr.mxu0 0.0
    %58 = vmatpush1.msra.mxu0 0.0
    %59 = vmatprep.subr.mxu0 0.0
    %60 = vmatpush1.msra.mxu0 0.0
    %61 = vmatprep.subr.mxu0 0.0
    %62 = vmatpush1.msra.mxu0 0.0
    %63 = vmatprep.subr.mxu0 0.0
    %64 = vmatpush1.msra.mxu0 0.0
    %65 = vmatprep.subr.mxu0 0.0
    %66 = vmatpush1.msra.mxu0 0.0
    %67 = vmatprep.subr.mxu0 0.0
    %68 = vmatpush1.msra.mxu0 0.0
    %69 = vmatprep.subr.mxu0 0.0
    %70 = vmatpush1.msra.mxu0 0.0
    %71 = vmatprep.subr.mxu0 0.0
    %72 = vmatpush1.msra.mxu0 0.0
    %73 = vmatprep.subr.mxu0 0.0
    %74 = vmatpush1.msra.mxu0 0.0
    %75 = vmatprep.subr.mxu0 0.0
    %76 = vmatpush1.msra.mxu0 0.0
    %77 = vmatprep.subr.mxu0 0.0
    %78 = vmatpush1.msra.mxu0 0.0
    %79 = vmatprep.subr.mxu0 0.0
    %80 = vmatpush1.msra.mxu0 0.0
    %81 = vmatprep.subr.mxu0 0.0
    %82 = vmatpush1.msra.mxu0 0.0
    %83 = vmatprep.subr.mxu0 0.0
    %84 = vmatpush1.msra.mxu0 0.0
    %85 = vmatprep.subr.mxu0 0.0
    %86 = vmatpush1.msra.mxu0 0.0
    %87 = vmatprep.subr.mxu0 0.0
    %88 = vmatpush1.msra.mxu0 0.0
    %89 = vmatprep.subr.mxu0 0.0
    %90 = vmatpush1.msra.mxu0 0.0
    %91 = vmatprep.subr.mxu0 0.0
    %92 = vmatpush1.msra.mxu0 0.0
    %93 = vmatprep.subr.mxu0 0.0
    %94 = vmatpush1.msra.mxu0 0.0
    %95 = vmatprep.subr.mxu0 0.0
    %96 = vmatpush1.msra.mxu0 0.0
    %97 = vmatprep.subr.mxu0 0.0
    %98 = vmatpush1.msra.mxu0 0.0
    %99 = vmatprep.subr.mxu0 0.0
    %100 = vmatpush1.msra.mxu0 0.0
    %101 = vmatprep.subr.mxu0 0.0
    %102 = vmatpush1.msra.mxu0 0.0
    %103 = vmatprep.subr.mxu0 0.0
    %104 = vmatpush1.msra.mxu0 0.0
    %105 = vmatprep.subr.mxu0 0.0
    %106 = vmatpush1.msra.mxu0 0.0
    %107 = vmatprep.subr.mxu0 0.0
    %108 = vmatpush1.msra.mxu0 0.0
    %109 = vmatprep.subr.mxu0 0.0
    %110 = vmatpush1.msra.mxu0 0.0
    %111 = vmatprep.subr.mxu0 0.0
    %112 = vmatpush1.msra.mxu0 0.0
    %113 = vmatprep.subr.mxu0 0.0
    %114 = vmatpush1.msra.mxu0 0.0
    %115 = vmatprep.subr.mxu0 0.0
    %116 = vmatpush1.msra.mxu0 0.0
    %117 = vmatprep.mubr.f32.mxu0 0.0
    %118 = vmatmul.mubr.f32.gmra.mrb[0].mxu0 %v51
    %v119 = vpop.f32.mrb[0].mxu0
    %v120 = vadd.f32 0.0, %v119
    %v121 = vpop.f32.mrb[0].mxu0
    %122 = vdwg.mxu0
    %v123 = vld [vmem:[#allocation7] sm:$0xff]
    %v124 = vadd.f32 %v123, %v120
    %vm125 = vcmask 261120
    %126 = vst.msk [vmem:[#allocation7] sm:$0xff] %vm125, %v124
    // Predicated region
    $region18: #{tpu_custom_call.1} parent=1 // pred_check
      _
    $region19: #{tpu_custom_call.1} parent=1 // pred_check_branch
      %128 = sbr.rel (0) target = $region21
    $region20: #{tpu_custom_call.1} parent=1 // pred_region
      %s130 = ssub.s32 128, 128
      %131 = vsyncadd [#allocation6], %s130
      %s133 = sshll.u32 [#allocation7], 4
      %s134 = int_to_ptr.vmem [resolvable:$true] %s133
      %136 = dma.vmem_to_hbm [thread:$0]  %s134, 128, %s3, [#allocation6]
    $region21: #{tpu_custom_call.1} parent=1 // pred_fallthru
      _
    // Predicated region
    $region22: #{tpu_custom_call.1} parent=1 // pred_check
      _
    $region23: #{tpu_custom_call.1} parent=1 // pred_check_branch
      %138 = sbr.rel (0) target = $region25
    $region24: #{tpu_custom_call.1} parent=1 // pred_region
      %139 = dma.done [#allocation6], 128
    $region25: #{tpu_custom_call.1} parent=1 // pred_fallthru
      _
    %140 = vsyncpa [#allocation5], 1
    %141 = vsyncpa [#allocation6], 1

</llo_original>
